<compile_context>
chip_gen: v7x
topology: tpu7x:2x2x1
jax: 0.10.0
libtpu: 0.0.40
codegen_flags: <defaults>
</compile_context>

<pallas_src>
import jax
import jax.numpy as jnp
from jax.experimental import pallas as pl
from jax.experimental.pallas import tpu as pltpu


def _ensemble_kernel(x_ref, w_ref, b_ref, o_ref):
    # x_ref: (1, C, S_TILE)      -- one batch element, one spatial tile
    # w_ref: (M, C_out, C)       -- all model heads, pre-scaled by 1/M
    # b_ref: (M, C_out, 1)       -- all model biases, pre-scaled by 1/M
    # o_ref: (1, C_out, S_TILE)  -- lane-dense output tile
    x = x_ref[0]                                   # (C, S_TILE)
    num_models = w_ref.shape[0]                    # static

    # Ensemble mean of affine heads, unrolled over the (tiny) model axis.
    acc = jnp.dot(w_ref[0], x, preferred_element_type=jnp.float32) + b_ref[0]
    for m in range(1, num_models):
        acc = acc + jnp.dot(w_ref[m], x,
                            preferred_element_type=jnp.float32) + b_ref[m]

    o_ref[0] = acc.astype(o_ref.dtype)


def ensemble_net_forward(x_nchw, weights, biases, *, s_tile=16384):
    """EnsembleNet.forward with method='average'.

    x_nchw:  (N, C, H, W) float32
    weights: (M, C, C_out) float32   -- one 1x1-conv head per submodule
    biases:  (M, C_out)    float32
    returns: (N, C_out, H, W) float32
    """
    N, C, H, W = x_nchw.shape
    M, Cw, C_out = weights.shape
    assert Cw == C

    HW = H * W
    s_tile = min(s_tile, HW)
    assert HW % s_tile == 0 and (s_tile % 128 == 0 or s_tile == HW), \
        "spatial tile must divide H*W and be a multiple of 128 (or the full extent)"

    # NCHW -> (N, C, H*W): pure metadata reshape, no data movement.
    x_ncs = x_nchw.reshape(N, C, HW)

    # Fold the ensemble mean into the (tiny) weights / biases; transpose to
    # (C_out, C) so the kernel does W @ x (channels are the contraction dim).
    w_t = (jnp.transpose(weights, (0, 2, 1)) / M).astype(jnp.float32)  # (M, C_out, C)
    b_t = (biases / M).reshape(M, C_out, 1).astype(jnp.float32)        # (M, C_out, 1)

    grid = (N, HW // s_tile)

    out = pl.pallas_call(
        _ensemble_kernel,
        out_shape=jax.ShapeDtypeStruct((N, C_out, HW), jnp.float32),
        grid_spec=pltpu.PrefetchScalarGridSpec(
            num_scalar_prefetch=0,
            grid=grid,
            in_specs=[
                # activations: one batch element x one spatial tile
                pl.BlockSpec((1, C, s_tile), lambda n, s: (n, 0, s)),
                # all model weights, untiled (tiny), same block every step
                pl.BlockSpec((M, C_out, C), lambda n, s: (0, 0, 0)),
                # all model biases, untiled (tiny)
                pl.BlockSpec((M, C_out, 1), lambda n, s: (0, 0, 0)),
            ],
            out_specs=pl.BlockSpec((1, C_out, s_tile), lambda n, s: (n, 0, s)),
        ),
        compiler_params=pltpu.CompilerParams(
            dimension_semantics=("parallel", "parallel")),
    )(x_ncs, w_t, b_t)

    # (N, C_out, H*W) -> (N, C_out, H, W): free reshape, already NCHW.
    return out.reshape(N, C_out, H, W)


def _reference(x_nchw, weights, biases):
    # Pure-JAX reference following the original module: per-model 1x1 conv,
    # stack along the model axis, mean.
    N, C, H, W = x_nchw.shape
    C_out = weights.shape[-1]
    x_flat = jnp.transpose(x_nchw, (0, 2, 3, 1)).reshape(N * H * W, C)
    logits = jnp.einsum("pc,mco->mpo", x_flat, weights) + biases[:, None, :]
    mean = logits.mean(axis=0)  # average over models
    return jnp.transpose(mean.reshape(N, H, W, C_out), (0, 3, 1, 2))


if __name__ == "__main__":
    key = jax.random.PRNGKey(0)
    k_x, k_w, k_b = jax.random.split(key, 3)

    # Small shapes: batch=2, channels=4, spatial=16x16, ensemble of 3 models,
    # 1 output logit channel (binary segmentation logits).
    N, C, H, W = 2, 4, 16, 16
    M, C_out = 3, 1

    x = jax.random.normal(k_x, (N, C, H, W), dtype=jnp.float32)
    weights = jax.random.normal(k_w, (M, C, C_out), dtype=jnp.float32) * 0.1
    biases = jax.random.normal(k_b, (M, C_out), dtype=jnp.float32) * 0.01

    out = ensemble_net_forward(x, weights, biases)
    out = jax.block_until_ready(out)

    ref = _reference(x, weights, biases)
    assert out.shape == (N, C_out, H, W)
    assert jnp.allclose(out, ref, atol=1e-5, rtol=1e-5)

    print("KERNEL_OK")
</pallas_src>

<mosaic_0001>
module attributes {stable_mosaic.version = 11 : i64} {
  func.func @_ensemble_kernel(%arg0: i32, %arg1: i32, %arg2: memref<1x4x256xf32, #tpu.memory_space<vmem>>, %arg3: memref<3x1x4xf32, #tpu.memory_space<vmem>>, %arg4: memref<3x1x1xf32, #tpu.memory_space<vmem>>, %arg5: memref<1x1x256xf32, #tpu.memory_space<vmem>>) attributes {dimension_semantics = [#tpu.dimension_semantics<parallel>, #tpu.dimension_semantics<parallel>], iteration_bounds = array<i64: 2, 1>, scalar_prefetch = 0 : i64, scratch_operands = 0 : i64, tpu.core_type = #tpu.core_type<tc>, window_params = [{transform_indices = @transform_0, window_bounds = array<i64: 1, 4, 256>}, {pipeline_mode = #tpu.pipeline_mode<synchronous>, transform_indices = @transform_1, window_bounds = array<i64: 3, 1, 4>}, {pipeline_mode = #tpu.pipeline_mode<synchronous>, transform_indices = @transform_2, window_bounds = array<i64: 3, 1, 1>}, {transform_indices = @transform_3, window_bounds = array<i64: 1, 1, 256>}]} {
    %c0 = arith.constant 0 : index
    %c0_0 = arith.constant 0 : index
    %c0_1 = arith.constant 0 : index
    %0 = vector.load %arg2[%c0, %c0_0, %c0_1] : memref<1x4x256xf32, #tpu.memory_space<vmem>>, vector<1x4x256xf32>
    %1 = vector.shape_cast %0 : vector<1x4x256xf32> to vector<4x256xf32>
    %c0_2 = arith.constant 0 : index
    %c0_3 = arith.constant 0 : index
    %c0_4 = arith.constant 0 : index
    %2 = vector.load %arg3[%c0_2, %c0_3, %c0_4] : memref<3x1x4xf32, #tpu.memory_space<vmem>>, vector<1x1x4xf32>
    %3 = vector.shape_cast %2 : vector<1x1x4xf32> to vector<1x4xf32>
    %cst = arith.constant dense<0.000000e+00> : vector<1x256xf32>
    %4 = tpu.matmul %3, %1, %cst {dimension_numbers = #tpu.dot_dimension_numbers<[1], [0], [0], [1], [0, 0, 1, 1], [], []>} : vector<1x4xf32>, vector<4x256xf32>, vector<1x256xf32> -> vector<1x256xf32>
    %c0_5 = arith.constant 0 : index
    %c0_6 = arith.constant 0 : index
    %c0_7 = arith.constant 0 : index
    %5 = vector.load %arg4[%c0_5, %c0_6, %c0_7] : memref<3x1x1xf32, #tpu.memory_space<vmem>>, vector<1x1x1xf32>
    %6 = vector.shape_cast %5 : vector<1x1x1xf32> to vector<1x1xf32>
    %7 = vector.broadcast %6 : vector<1x1xf32> to vector<1x256xf32>
    %8 = arith.addf %4, %7 : vector<1x256xf32>
    %c1 = arith.constant 1 : index
    %c0_8 = arith.constant 0 : index
    %c0_9 = arith.constant 0 : index
    %9 = vector.load %arg3[%c1, %c0_8, %c0_9] : memref<3x1x4xf32, #tpu.memory_space<vmem>>, vector<1x1x4xf32>
    %10 = vector.shape_cast %9 : vector<1x1x4xf32> to vector<1x4xf32>
    %cst_10 = arith.constant dense<0.000000e+00> : vector<1x256xf32>
    %11 = tpu.matmul %10, %1, %cst_10 {dimension_numbers = #tpu.dot_dimension_numbers<[1], [0], [0], [1], [0, 0, 1, 1], [], []>} : vector<1x4xf32>, vector<4x256xf32>, vector<1x256xf32> -> vector<1x256xf32>
    %12 = arith.addf %8, %11 : vector<1x256xf32>
    %c1_11 = arith.constant 1 : index
    %c0_12 = arith.constant 0 : index
    %c0_13 = arith.constant 0 : index
    %13 = vector.load %arg4[%c1_11, %c0_12, %c0_13] : memref<3x1x1xf32, #tpu.memory_space<vmem>>, vector<1x1x1xf32>
    %14 = vector.shape_cast %13 : vector<1x1x1xf32> to vector<1x1xf32>
    %15 = vector.broadcast %14 : vector<1x1xf32> to vector<1x256xf32>
    %16 = arith.addf %12, %15 : vector<1x256xf32>
    %c2 = arith.constant 2 : index
    %c0_14 = arith.constant 0 : index
    %c0_15 = arith.constant 0 : index
    %17 = vector.load %arg3[%c2, %c0_14, %c0_15] : memref<3x1x4xf32, #tpu.memory_space<vmem>>, vector<1x1x4xf32>
    %18 = vector.shape_cast %17 : vector<1x1x4xf32> to vector<1x4xf32>
    %cst_16 = arith.constant dense<0.000000e+00> : vector<1x256xf32>
    %19 = tpu.matmul %18, %1, %cst_16 {dimension_numbers = #tpu.dot_dimension_numbers<[1], [0], [0], [1], [0, 0, 1, 1], [], []>} : vector<1x4xf32>, vector<4x256xf32>, vector<1x256xf32> -> vector<1x256xf32>
    %20 = arith.addf %16, %19 : vector<1x256xf32>
    %c2_17 = arith.constant 2 : index
    %c0_18 = arith.constant 0 : index
    %c0_19 = arith.constant 0 : index
    %21 = vector.load %arg4[%c2_17, %c0_18, %c0_19] : memref<3x1x1xf32, #tpu.memory_space<vmem>>, vector<1x1x1xf32>
    %22 = vector.shape_cast %21 : vector<1x1x1xf32> to vector<1x1xf32>
    %23 = vector.broadcast %22 : vector<1x1xf32> to vector<1x256xf32>
    %24 = arith.addf %20, %23 : vector<1x256xf32>
    %c0_20 = arith.constant 0 : index
    %c0_21 = arith.constant 0 : index
    %c0_22 = arith.constant 0 : index
    %25 = vector.load %arg5[%c0_20, %c0_21, %c0_22] : memref<1x1x256xf32, #tpu.memory_space<vmem>>, vector<1x1x256xf32>
    %26 = vector.shape_cast %25 : vector<1x1x256xf32> to vector<1x256xf32>
    %27 = vector.shape_cast %24 : vector<1x256xf32> to vector<1x1x256xf32>
    tpu.vector_store %arg5[%c0_20, %c0_21, %c0_22], %27 {strides = array<i32>} : memref<1x1x256xf32, #tpu.memory_space<vmem>>, vector<1x1x256xf32>,
    return
  }
  func.func @transform_0(%arg0: i32, %arg1: i32) -> (i32, i32, i32) {
    %c0_i32 = arith.constant 0 : i32
    %c0_i32_0 = arith.constant 0 : i32
    return %arg0, %c0_i32, %arg1 : i32, i32, i32
  }
  func.func @transform_1(%arg0: i32, %arg1: i32) -> (i32, i32, i32) {
    %c0_i32 = arith.constant 0 : i32
    %c0_i32_0 = arith.constant 0 : i32
    %c0_i32_1 = arith.constant 0 : i32
    %c0_i32_2 = arith.constant 0 : i32
    return %c0_i32, %c0_i32_0, %c0_i32_1 : i32, i32, i32
  }
  func.func @transform_2(%arg0: i32, %arg1: i32) -> (i32, i32, i32) {
    %c0_i32 = arith.constant 0 : i32
    %c0_i32_0 = arith.constant 0 : i32
    %c0_i32_1 = arith.constant 0 : i32
    %c0_i32_2 = arith.constant 0 : i32
    return %c0_i32, %c0_i32_0, %c0_i32_1 : i32, i32, i32
  }
  func.func @transform_3(%arg0: i32, %arg1: i32) -> (i32, i32, i32) {
    %c0_i32 = arith.constant 0 : i32
    %c0_i32_0 = arith.constant 0 : i32
    return %arg0, %c0_i32, %arg1 : i32, i32, i32
  }
}

</mosaic_0001>

<llo_original>
// kernel: tpu_custom_call.1
$region0: #{tpu_custom_call.1}
  #allocation0 [shape = 'u32[]', space=smem, size = 0x4, offset = 0x4, fixed_abs, tag = 'smem constant byte address 0x4 - core index']
  #allocation1 [shape = 'u32[144,128]{1,0:T(1,128)}', space=vmem, size = 0x12000, scoped, tag = 'internal scratch']
  %s0 = inlined_call_operand.hbm [shape: f32[2,4,256], index: 0, kind: input, shape index: {}]
  %s1 = inlined_call_operand.vmem [shape: f32[3,1,4], index: 1, kind: input, shape index: {}]
  %s2 = inlined_call_operand.vmem [shape: f32[3,1,1], index: 2, kind: input, shape index: {}]
  %s3 = inlined_call_operand.hbm [shape: f32[2,1,256], index: 3, kind: output, shape index: {}]
  %s4 = sld [smem:[#allocation0]]
  $region49: #{tpu_custom_call.1} parent=0
    _
  %s6 = ssub.s32 1, %s4
  %s7 = scalar_select 0, %s6, %s4
  $region1: #{tpu_custom_call.1} parent=0
    #allocation2 [shape = 'u8[8192]{0}', space=vmem, size = 0x2000, scoped, tag = 'input window, operand 0']
    #allocation3 [shape = 's32[2]{0}', space=sflag, size = 0x8, scoped, tag = 'scoped memory for tpu_custom_call.1']
    #allocation4 [shape = 's32[2]{0}', space=sflag, size = 0x8, scoped, tag = 'scoped memory for tpu_custom_call.1']
    #allocation5 [shape = 'u8[2048]{0}', space=vmem, size = 0x800, scoped, tag = 'output window, operand 0']
    %8 = vsyncpa [#allocation3], 0
    %s9 = scalar_lea.sflag [#allocation3], 1
    %10 = vsyncpa %s9, 0
    %11 = vsyncpa [#allocation4], 0
    %s12 = scalar_lea.sflag [#allocation4], 1
    %13 = vsyncpa %s12, 0
    loop: start=0, step=1, limit=4
    $region2: #{tpu_custom_call.1} parent=1 // loop_pre_header
      _
    $region3: #{tpu_custom_call.1} parent=1 // loop_header
      %s15 = sphi 0, %s19
      %p16 = scmp.ge.s32.totalorder %s15, 4
      %s22 = sphi 0, %s34
      %s23 = sphi 0, %s30
      %s24 = sphi 0, %s22
      %s25 = sphi 0, %s23
      %s26 = sphi 0, %s24
      %s27 = sphi 0, %s25
      %s39 = sphi 0, %s41
      %s42 = sphi 0, %s39
      %s43 = sphi 0, %s42
      %s59 = sphi 0, %s43
      %s63 = sphi 0, %s63
      %s65 = sphi 0, %s63
      %s66 = sphi 0, %s65
      %s80 = sphi 0, %s66
      %s84 = sphi 0, %s84
      %s86 = sphi 0, %s84
      %s87 = sphi 0, %s86
      %s101 = sphi 0, %s87
      %s109 = sphi 0, %s111
      %s112 = sphi 0, %s109
      %s113 = sphi 0, %s112
      %s129 = sphi 0, %s113
    $region4: #{tpu_custom_call.1} parent=1 // loop_header_branch
      %18 = sbr.rel (%p16) target = $region8
    $region5: #{tpu_custom_call.1} parent=1 // loop_body
      %s20 = ssub.s32 %s15, 1
      %s21 = ssub.s32 %s15, 2
      %s28 = sadd.s32 1, %s23
      %p29 = scmp.ge.s32.totalorder %s28, 1
      %s30 = scalar_select %p29, 0, %s28
      %s31 = sadd.s32 1, %s22
      %s32 = scalar_select %p29, %s31, %s22
      %p33 = scmp.ge.s32.totalorder %s32, 2
      %s34 = scalar_select %p33, 0, %s32
      %s35 = ssub.s32 %s22, %s34
      %s36 = ssub.s32 %s23, %s30
      %s37 = sor.u32 %s35, %s36
      %p38 = scmp.eq.s32.totalorder %s37, 0
      %s40 = sadd.s32 %s39, 1
      %s41 = scalar_select %p38, %s39, %s40
      %p44 = pneg %p38
      %p45 = scmp.eq.s32.totalorder %s15, 1
      %p46 = por %p44, %p45
      %p47 = scmp.ne.s32.totalorder %s39, %s42
      %p48 = scmp.eq.s32.totalorder %s15, 0
      %p49 = por %p47, %p48
      %p50 = scmp.ne.s32.totalorder %s39, %s42
      %p51 = scmp.eq.s32.totalorder %s20, 1
      %p52 = por %p50, %p51
      %p53 = scmp.ne.s32.totalorder %s42, %s43
      %p54 = scmp.eq.s32.totalorder %s20, 0
      %p55 = por %p53, %p54
      %p56 = scmp.ne.s32.totalorder %s42, %s43
      %p57 = scmp.eq.s32.totalorder %s21, 1
      %p58 = por %p56, %p57
      %p60 = scmp.ne.s32.totalorder %s43, %s59
      %p61 = scmp.eq.s32.totalorder %s21, 0
      %p62 = por %p60, %p61
      %s64 = sadd.s32 %s63, 1
      %p67 = scmp.eq.s32.totalorder %s15, 1
      %p68 = scmp.ne.s32.totalorder %s63, %s65
      %p69 = scmp.eq.s32.totalorder %s15, 0
      %p70 = por %p68, %p69
      %p71 = scmp.ne.s32.totalorder %s63, %s65
      %p72 = scmp.eq.s32.totalorder %s20, 1
      %p73 = por %p71, %p72
      %p74 = scmp.ne.s32.totalorder %s65, %s66
      %p75 = scmp.eq.s32.totalorder %s20, 0
      %p76 = por %p74, %p75
      %p77 = scmp.ne.s32.totalorder %s65, %s66
      %p78 = scmp.eq.s32.totalorder %s21, 1
      %p79 = por %p77, %p78
      %p81 = scmp.ne.s32.totalorder %s66, %s80
      %p82 = scmp.eq.s32.totalorder %s21, 0
      %p83 = por %p81, %p82
      %s85 = sadd.s32 %s84, 1
      %p88 = scmp.eq.s32.totalorder %s15, 1
      %p89 = scmp.ne.s32.totalorder %s84, %s86
      %p90 = scmp.eq.s32.totalorder %s15, 0
      %p91 = por %p89, %p90
      %p92 = scmp.ne.s32.totalorder %s84, %s86
      %p93 = scmp.eq.s32.totalorder %s20, 1
      %p94 = por %p92, %p93
      %p95 = scmp.ne.s32.totalorder %s86, %s87
      %p96 = scmp.eq.s32.totalorder %s20, 0
      %p97 = por %p95, %p96
      %p98 = scmp.ne.s32.totalorder %s86, %s87
      %p99 = scmp.eq.s32.totalorder %s21, 1
      %p100 = por %p98, %p99
      %p102 = scmp.ne.s32.totalorder %s87, %s101
      %p103 = scmp.eq.s32.totalorder %s21, 0
      %p104 = por %p102, %p103
      %s105 = ssub.s32 %s22, %s34
      %s106 = ssub.s32 %s23, %s30
      %s107 = sor.u32 %s105, %s106
      %p108 = scmp.eq.s32.totalorder %s107, 0
      %s110 = sadd.s32 %s109, 1
      %s111 = scalar_select %p108, %s109, %s110
      %p114 = pneg %p108
      %p115 = scmp.eq.s32.totalorder %s15, 1
      %p116 = por %p114, %p115
      %p117 = scmp.ne.s32.totalorder %s109, %s112
      %p118 = scmp.eq.s32.totalorder %s15, 0
      %p119 = por %p117, %p118
      %p120 = scmp.ne.s32.totalorder %s109, %s112
      %p121 = scmp.eq.s32.totalorder %s20, 1
      %p122 = por %p120, %p121
      %p123 = scmp.ne.s32.totalorder %s112, %s113
      %p124 = scmp.eq.s32.totalorder %s20, 0
      %p125 = por %p123, %p124
      %p126 = scmp.ne.s32.totalorder %s112, %s113
      %p127 = scmp.eq.s32.totalorder %s21, 1
      %p128 = por %p126, %p127
      %p130 = scmp.ne.s32.totalorder %s113, %s129
      %p131 = scmp.eq.s32.totalorder %s21, 0
      %p132 = por %p130, %p131
      %p133 = scmp.le.s32.totalorder 1, %s15
      %p134 = scmp.lt.s32.totalorder %s15, 3
      %p135 = pnand %p133, %p134
      %p136 = pneg %p135
      // Predicated region
      $region9: #{tpu_custom_call.1} parent=5 // pred_check
        _
      $region10: #{tpu_custom_call.1} parent=5 // pred_check_branch
        %138 = sbr.rel (%p135) target = $region12
      $region11: #{tpu_custom_call.1} parent=5 // pred_region
        %s139 = ssub.s32 %s15, 1
        // Predicated region
        $region13: #{tpu_custom_call.1} parent=11 // pred_check
          %p140 = pneg %p76
        $region14: #{tpu_custom_call.1} parent=11 // pred_check_branch
          %142 = sbr.rel (%p140) target = $region16
        $region15: #{tpu_custom_call.1} parent=11 // pred_region
          _
        $region16: #{tpu_custom_call.1} parent=11 // pred_fallthru
          _
        // Predicated region
        $region17: #{tpu_custom_call.1} parent=11 // pred_check
          %p143 = pneg %p97
        $region18: #{tpu_custom_call.1} parent=11 // pred_check_branch
          %145 = sbr.rel (%p143) target = $region20
        $region19: #{tpu_custom_call.1} parent=11 // pred_region
          _
        $region20: #{tpu_custom_call.1} parent=11 // pred_fallthru
          _
      $region12: #{tpu_custom_call.1} parent=5 // pred_fallthru
        _
      %p146 = scmp.lt.s32.totalorder %s15, 2
      // Predicated region
      $region21: #{tpu_custom_call.1} parent=5 // pred_check
        %p147 = pneg %p146
      $region22: #{tpu_custom_call.1} parent=5 // pred_check_branch
        %149 = sbr.rel (%p147) target = $region24
      $region23: #{tpu_custom_call.1} parent=5 // pred_region
        // Predicated region
        $region25: #{tpu_custom_call.1} parent=23 // pred_check
          %p150 = pneg %p49
        $region26: #{tpu_custom_call.1} parent=23 // pred_check_branch
          %152 = sbr.rel (%p150) target = $region28
        $region27: #{tpu_custom_call.1} parent=23 // pred_region
          %s153 = sand.u32 %s39, 1
          %s154 = scalar_lea.sflag [#allocation3], %s153
          %s155 = sand.u32 %s39, 1
          %s156 = smul.addr %s155, 8
          %s157 = scalar_lea.vmem [#allocation2], %s156
          %s158 = smul.u32 2, %s23
          %s160 = ssub.s32 128, 128
          %161 = vsyncadd %s154, %s160
          %s162 = smul.addr %s22, 2
          %s163 = sadd.s32 %s158, %s162
          %s164 = smul.addr %s163, 64
          %s165 = scalar_lea.hbm %s0, %s164
          %s167 = sshll.u32 %s157, 4
          %s168 = int_to_ptr.vmem [resolvable:$true] %s167
          %170 = dma.hbm_to_vmem [thread:$0]  %s165, 128, %s168, %s154
        $region28: #{tpu_custom_call.1} parent=23 // pred_fallthru
          _
      $region24: #{tpu_custom_call.1} parent=5 // pred_fallthru
        _
      %p171 = scmp.le.s32.totalorder 1, %s15
      %p172 = scmp.lt.s32.totalorder %s15, 3
      %p173 = pnand %p171, %p172
      %p174 = pneg %p173
      // Predicated region
      $region29: #{tpu_custom_call.1} parent=5 // pred_check
        _
      $region30: #{tpu_custom_call.1} parent=5 // pred_check_branch
        %176 = sbr.rel (%p173) target = $region32
      $region31: #{tpu_custom_call.1} parent=5 // pred_region
        %s177 = ssub.s32 %s15, 1
        %s178 = sand.u32 %s42, 1
        %s179 = scalar_lea.sflag [#allocation3], %s178
        %s180 = sand.u32 %s42, 1
        %s181 = smul.addr %s180, 8
        %s182 = scalar_lea.vmem [#allocation2], %s181
        // Predicated region
        $region33: #{tpu_custom_call.1} parent=31 // pred_check
          %p183 = pneg %p55
        $region34: #{tpu_custom_call.1} parent=31 // pred_check_branch
          %185 = sbr.rel (%p183) target = $region36
        $region35: #{tpu_custom_call.1} parent=31 // pred_region
          %186 = dma.done %s179, 128
        $region36: #{tpu_custom_call.1} parent=31 // pred_fallthru
          _
        %s187 = sand.u32 %s42, 1
        %s188 = scalar_lea.sflag [#allocation3], %s187
        %s189 = sand.u32 %s42, 1
        %s190 = smul.addr %s189, 8
        %s191 = scalar_lea.vmem [#allocation2], %s190
        %p192 = pneg %p55
        %p193 = pneg %p52
        %p194 = pneg %p76
        %p195 = pneg %p73
        %p196 = pneg %p97
        %p197 = pneg %p94
        %p198 = pneg %p125
        %p199 = pneg %p122
        %s200 = sand.u32 %s112, 1
        %s201 = scalar_lea.sflag [#allocation4], %s200
        %s202 = sand.u32 %s112, 1
        %s203 = smul.addr %s202, 2
        %s204 = scalar_lea.vmem [#allocation5], %s203
        %s205 = smul.u32 2, %s25
        %s206 = smul.u32 2, %s25
        %v207 = vld [vmem:[%s182] sm:$0xff]
        %v208 = vld [vmem:[%s1] sm:$0x1]
        %v209 = vld [vmem:[%s2] sm:$0x1]
        %211 = vset.pattern.permute.xlu0 0
        %212 = vperm.xlu0 %211, %v209
        %v213 = vpop.permute.xlu0 %212
        %v215 = vlaneseq
        %v216 = vshrl.u32 %v215, 7
        %v217 = vsub.s32 0, %v216
        %v218 = vrot.slane %v213, %v217
        %v220 = vcombine.high %v207, %v207
        %vm221 = vcmask 31744
        %v223 = vsel %vm221, %v208, 0
        %vm225 = vcmask 1043456
        %v226 = vsel %vm225, %v207, 0
        %v228 = vsel %vm225, %v220, 0
        %230 = vmatprep.subr.mxu0 %v228
        %231 = vmatpush1.msra.mxu0 %v226
        %232 = vmatprep.subr.mxu0 0.0
        %233 = vmatpush1.msra.mxu0 0.0
        %234 = vmatprep.subr.mxu0 0.0
        %235 = vmatpush1.msra.mxu0 0.0
        %236 = vmatprep.subr.mxu0 0.0
        %237 = vmatpush1.msra.mxu0 0.0
        %238 = vmatprep.subr.mxu0 0.0
        %239 = vmatpush1.msra.mxu0 0.0
        %240 = vmatprep.subr.mxu0 0.0
        %241 = vmatpush1.msra.mxu0 0.0
        %242 = vmatprep.subr.mxu0 0.0
        %243 = vmatpush1.msra.mxu0 0.0
        %244 = vmatprep.subr.mxu0 0.0
        %245 = vmatpush1.msra.mxu0 0.0
        %246 = vmatprep.subr.mxu0 0.0
        %247 = vmatpush1.msra.mxu0 0.0
        %248 = vmatprep.subr.mxu0 0.0
        %249 = vmatpush1.msra.mxu0 0.0
        %250 = vmatprep.subr.mxu0 0.0
        %251 = vmatpush1.msra.mxu0 0.0
        %252 = vmatprep.subr.mxu0 0.0
        %253 = vmatpush1.msra.mxu0 0.0
        %254 = vmatprep.subr.mxu0 0.0
        %255 = vmatpush1.msra.mxu0 0.0
        %256 = vmatprep.subr.mxu0 0.0
        %257 = vmatpush1.msra.mxu0 0.0
        %258 = vmatprep.subr.mxu0 0.0
        %259 = vmatpush1.msra.mxu0 0.0
        %260 = vmatprep.subr.mxu0 0.0
        %261 = vmatpush1.msra.mxu0 0.0
        %262 = vmatprep.subr.mxu0 0.0
        %263 = vmatpush1.msra.mxu0 0.0
        %264 = vmatprep.subr.mxu0 0.0
        %265 = vmatpush1.msra.mxu0 0.0
        %266 = vmatprep.subr.mxu0 0.0
        %267 = vmatpush1.msra.mxu0 0.0
        %268 = vmatprep.subr.mxu0 0.0
        %269 = vmatpush1.msra.mxu0 0.0
        %270 = vmatprep.subr.mxu0 0.0
        %271 = vmatpush1.msra.mxu0 0.0
        %272 = vmatprep.subr.mxu0 0.0
        %273 = vmatpush1.msra.mxu0 0.0
        %274 = vmatprep.subr.mxu0 0.0
        %275 = vmatpush1.msra.mxu0 0.0
        %276 = vmatprep.subr.mxu0 0.0
        %277 = vmatpush1.msra.mxu0 0.0
        %278 = vmatprep.subr.mxu0 0.0
        %279 = vmatpush1.msra.mxu0 0.0
        %280 = vmatprep.subr.mxu0 0.0
        %281 = vmatpush1.msra.mxu0 0.0
        %282 = vmatprep.subr.mxu0 0.0
        %283 = vmatpush1.msra.mxu0 0.0
        %284 = vmatprep.subr.mxu0 0.0
        %285 = vmatpush1.msra.mxu0 0.0
        %286 = vmatprep.subr.mxu0 0.0
        %287 = vmatpush1.msra.mxu0 0.0
        %288 = vmatprep.subr.mxu0 0.0
        %289 = vmatpush1.msra.mxu0 0.0
        %290 = vmatprep.subr.mxu0 0.0
        %291 = vmatpush1.msra.mxu0 0.0
        %292 = vmatprep.subr.mxu0 0.0
        %293 = vmatpush1.msra.mxu0 0.0
        %294 = vmatprep.mubr.f32.mxu0 0.0
        %295 = vmatmul.mubr.f32.gmra.mrb[0].mxu0 %v223
        %v296 = vpop.f32.mrb[0].mxu0
        %v297 = vadd.f32 %v218, %v296
        %v298 = vpop.f32.mrb[0].mxu0
        %v299 = vadd.f32 %v218, %v298
        %300 = vdwg.mxu0
        %s301 = scalar_lea.vmem %s1, 1
        %v302 = vld [vmem:[%s301] sm:$0x1]
        %v304 = vsel %vm221, %v302, 0
        %306 = vmatprep.subr.mxu0 %v228
        %307 = vmatpush1.msra.mxu0 %v226
        %308 = vmatprep.subr.mxu0 0.0
        %309 = vmatpush1.msra.mxu0 0.0
        %310 = vmatprep.subr.mxu0 0.0
        %311 = vmatpush1.msra.mxu0 0.0
        %312 = vmatprep.subr.mxu0 0.0
        %313 = vmatpush1.msra.mxu0 0.0
        %314 = vmatprep.subr.mxu0 0.0
        %315 = vmatpush1.msra.mxu0 0.0
        %316 = vmatprep.subr.mxu0 0.0
        %317 = vmatpush1.msra.mxu0 0.0
        %318 = vmatprep.subr.mxu0 0.0
        %319 = vmatpush1.msra.mxu0 0.0
        %320 = vmatprep.subr.mxu0 0.0
        %321 = vmatpush1.msra.mxu0 0.0
        %322 = vmatprep.subr.mxu0 0.0
        %323 = vmatpush1.msra.mxu0 0.0
        %324 = vmatprep.subr.mxu0 0.0
        %325 = vmatpush1.msra.mxu0 0.0
        %326 = vmatprep.subr.mxu0 0.0
        %327 = vmatpush1.msra.mxu0 0.0
        %328 = vmatprep.subr.mxu0 0.0
        %329 = vmatpush1.msra.mxu0 0.0
        %330 = vmatprep.subr.mxu0 0.0
        %331 = vmatpush1.msra.mxu0 0.0
        %332 = vmatprep.subr.mxu0 0.0
        %333 = vmatpush1.msra.mxu0 0.0
        %334 = vmatprep.subr.mxu0 0.0
        %335 = vmatpush1.msra.mxu0 0.0
        %336 = vmatprep.subr.mxu0 0.0
        %337 = vmatpush1.msra.mxu0 0.0
        %338 = vmatprep.subr.mxu0 0.0
        %339 = vmatpush1.msra.mxu0 0.0
        %340 = vmatprep.subr.mxu0 0.0
        %341 = vmatpush1.msra.mxu0 0.0
        %342 = vmatprep.subr.mxu0 0.0
        %343 = vmatpush1.msra.mxu0 0.0
        %344 = vmatprep.subr.mxu0 0.0
        %345 = vmatpush1.msra.mxu0 0.0
        %346 = vmatprep.subr.mxu0 0.0
        %347 = vmatpush1.msra.mxu0 0.0
        %348 = vmatprep.subr.mxu0 0.0
        %349 = vmatpush1.msra.mxu0 0.0
        %350 = vmatprep.subr.mxu0 0.0
        %351 = vmatpush1.msra.mxu0 0.0
        %352 = vmatprep.subr.mxu0 0.0
        %353 = vmatpush1.msra.mxu0 0.0
        %354 = vmatprep.subr.mxu0 0.0
        %355 = vmatpush1.msra.mxu0 0.0
        %356 = vmatprep.subr.mxu0 0.0
        %357 = vmatpush1.msra.mxu0 0.0
        %358 = vmatprep.subr.mxu0 0.0
        %359 = vmatpush1.msra.mxu0 0.0
        %360 = vmatprep.subr.mxu0 0.0
        %361 = vmatpush1.msra.mxu0 0.0
        %362 = vmatprep.subr.mxu0 0.0
        %363 = vmatpush1.msra.mxu0 0.0
        %364 = vmatprep.subr.mxu0 0.0
        %365 = vmatpush1.msra.mxu0 0.0
        %366 = vmatprep.subr.mxu0 0.0
        %367 = vmatpush1.msra.mxu0 0.0
        %368 = vmatprep.subr.mxu0 0.0
        %369 = vmatpush1.msra.mxu0 0.0
        %370 = vmatprep.mubr.f32.mxu0 0.0
        %371 = vmatmul.mubr.f32.gmra.mrb[0].mxu0 %v304
        %v372 = vpop.f32.mrb[0].mxu0
        %v373 = vadd.f32 0.0, %v372
        %v374 = vpop.f32.mrb[0].mxu0
        %v375 = vadd.f32 0.0, %v374
        %376 = vdwg.mxu0
        %v377 = vadd.f32 %v297, %v373
        %v378 = vadd.f32 %v299, %v375
        %s379 = scalar_lea.vmem %s2, 1
        %v380 = vld [vmem:[%s379] sm:$0x1]
        %382 = vset.pattern.permute.xlu0 0
        %383 = vperm.xlu0 %382, %v380
        %v384 = vpop.permute.xlu0 %383
        %v386 = vlaneseq
        %v387 = vshrl.u32 %v386, 7
        %v388 = vsub.s32 0, %v387
        %v389 = vrot.slane %v384, %v388
        %v390 = vadd.f32 %v377, %v389
        %v391 = vadd.f32 %v378, %v389
        %s392 = scalar_lea.vmem %s1, 2
        %v393 = vld [vmem:[%s392] sm:$0x1]
        %v395 = vsel %vm221, %v393, 0
        %397 = vmatprep.subr.mxu0 %v228
        %398 = vmatpush1.msra.mxu0 %v226
        %399 = vmatprep.subr.mxu0 0.0
        %400 = vmatpush1.msra.mxu0 0.0
        %401 = vmatprep.subr.mxu0 0.0
        %402 = vmatpush1.msra.mxu0 0.0
        %403 = vmatprep.subr.mxu0 0.0
        %404 = vmatpush1.msra.mxu0 0.0
        %405 = vmatprep.subr.mxu0 0.0
        %406 = vmatpush1.msra.mxu0 0.0
        %407 = vmatprep.subr.mxu0 0.0
        %408 = vmatpush1.msra.mxu0 0.0
        %409 = vmatprep.subr.mxu0 0.0
        %410 = vmatpush1.msra.mxu0 0.0
        %411 = vmatprep.subr.mxu0 0.0
        %412 = vmatpush1.msra.mxu0 0.0
        %413 = vmatprep.subr.mxu0 0.0
        %414 = vmatpush1.msra.mxu0 0.0
        %415 = vmatprep.subr.mxu0 0.0
        %416 = vmatpush1.msra.mxu0 0.0
        %417 = vmatprep.subr.mxu0 0.0
        %418 = vmatpush1.msra.mxu0 0.0
        %419 = vmatprep.subr.mxu0 0.0
        %420 = vmatpush1.msra.mxu0 0.0
        %421 = vmatprep.subr.mxu0 0.0
        %422 = vmatpush1.msra.mxu0 0.0
        %423 = vmatprep.subr.mxu0 0.0
        %424 = vmatpush1.msra.mxu0 0.0
        %425 = vmatprep.subr.mxu0 0.0
        %426 = vmatpush1.msra.mxu0 0.0
        %427 = vmatprep.subr.mxu0 0.0
        %428 = vmatpush1.msra.mxu0 0.0
        %429 = vmatprep.subr.mxu0 0.0
        %430 = vmatpush1.msra.mxu0 0.0
        %431 = vmatprep.subr.mxu0 0.0
        %432 = vmatpush1.msra.mxu0 0.0
        %433 = vmatprep.subr.mxu0 0.0
        %434 = vmatpush1.msra.mxu0 0.0
        %435 = vmatprep.subr.mxu0 0.0
        %436 = vmatpush1.msra.mxu0 0.0
        %437 = vmatprep.subr.mxu0 0.0
        %438 = vmatpush1.msra.mxu0 0.0
        %439 = vmatprep.subr.mxu0 0.0
        %440 = vmatpush1.msra.mxu0 0.0
        %441 = vmatprep.subr.mxu0 0.0
        %442 = vmatpush1.msra.mxu0 0.0
        %443 = vmatprep.subr.mxu0 0.0
        %444 = vmatpush1.msra.mxu0 0.0
        %445 = vmatprep.subr.mxu0 0.0
        %446 = vmatpush1.msra.mxu0 0.0
        %447 = vmatprep.subr.mxu0 0.0
        %448 = vmatpush1.msra.mxu0 0.0
        %449 = vmatprep.subr.mxu0 0.0
        %450 = vmatpush1.msra.mxu0 0.0
        %451 = vmatprep.subr.mxu0 0.0
        %452 = vmatpush1.msra.mxu0 0.0
        %453 = vmatprep.subr.mxu0 0.0
        %454 = vmatpush1.msra.mxu0 0.0
        %455 = vmatprep.subr.mxu0 0.0
        %456 = vmatpush1.msra.mxu0 0.0
        %457 = vmatprep.subr.mxu0 0.0
        %458 = vmatpush1.msra.mxu0 0.0
        %459 = vmatprep.subr.mxu0 0.0
        %460 = vmatpush1.msra.mxu0 0.0
        %461 = vmatprep.mubr.f32.mxu0 0.0
        %462 = vmatmul.mubr.f32.gmra.mrb[0].mxu0 %v395
        %v463 = vpop.f32.mrb[0].mxu0
        %v464 = vadd.f32 0.0, %v463
        %v465 = vpop.f32.mrb[0].mxu0
        %v466 = vadd.f32 0.0, %v465
        %467 = vdwg.mxu0
        %v468 = vadd.f32 %v390, %v464
        %v469 = vadd.f32 %v391, %v466
        %s470 = scalar_lea.vmem %s2, 2
        %v471 = vld [vmem:[%s470] sm:$0x1]
        %473 = vset.pattern.permute.xlu0 0
        %474 = vperm.xlu0 %473, %v471
        %v475 = vpop.permute.xlu0 %474
        %v477 = vlaneseq
        %v478 = vshrl.u32 %v477, 7
        %v479 = vsub.s32 0, %v478
        %v480 = vrot.slane %v475, %v479
        %v481 = vadd.f32 %v468, %v480
        %v482 = vadd.f32 %v469, %v480
        %v485 = vcombine.low %v481, %v482
        %v487 = vunpack.c.l.s4 1966171168
        %v488 = vunpack.c.0.s8 %v487
        %v489 = vlaneseq
        %v490 = vshrl.u32 %v489, 7
        %v491 = vsub.s32 %v488, %v490
        %v492 = vrot.slane %v485, %v491
        %v494 = vunpack.c.l.s4 1966171168
        %v495 = vunpack.c.0.s8 %v494
        %v496 = vlaneseq
        %v497 = vshrl.u32 %v496, 7
        %v498 = vsub.s32 %v495, %v497
        %v499 = vrot.slane %v492, %v498
        %v501 = vlaneseq
        %vm502 = vcmp.ge.s32.totalorder %v501, 0
        %vm503 = vcmp.lt.s32.totalorder %v501, 256
        %vm504 = vmand %vm502, %vm503
        %505 = vst.msk [vmem:[%s204] sm:$0x3] %vm504, %v499
        %s506 = sand.u32 %s112, 1
        %s507 = scalar_lea.sflag [#allocation4], %s506
        %s508 = sand.u32 %s112, 1
        %s509 = smul.addr %s508, 2
        %s510 = scalar_lea.vmem [#allocation5], %s509
        // Predicated region
        $region37: #{tpu_custom_call.1} parent=31 // pred_check
          %p511 = pneg %p122
        $region38: #{tpu_custom_call.1} parent=31 // pred_check_branch
          %513 = sbr.rel (%p511) target = $region40
        $region39: #{tpu_custom_call.1} parent=31 // pred_region
          %s514 = smul.u32 2, %s25
          %s516 = ssub.s32 32, 32
          %517 = vsyncadd %s507, %s516
          %s518 = smul.addr %s24, 2
          %s519 = sadd.s32 %s514, %s518
          %s520 = smul.addr %s519, 16
          %s521 = scalar_lea.hbm %s3, %s520
          %s523 = sshll.u32 %s510, 4
          %s524 = int_to_ptr.vmem [resolvable:$true] %s523
          %526 = dma.vmem_to_hbm [thread:$0]  %s524, 32, %s521, %s507
        $region40: #{tpu_custom_call.1} parent=31 // pred_fallthru
          _
      $region32: #{tpu_custom_call.1} parent=5 // pred_fallthru
        _
      %p527 = scmp.le.s32.totalorder 2, %s15
      // Predicated region
      $region41: #{tpu_custom_call.1} parent=5 // pred_check
        %p528 = pneg %p527
      $region42: #{tpu_custom_call.1} parent=5 // pred_check_branch
        %530 = sbr.rel (%p528) target = $region44
      $region43: #{tpu_custom_call.1} parent=5 // pred_region
        %s531 = ssub.s32 %s15, 2
        // Predicated region
        $region45: #{tpu_custom_call.1} parent=43 // pred_check
          %p532 = pneg %p128
        $region46: #{tpu_custom_call.1} parent=43 // pred_check_branch
          %534 = sbr.rel (%p532) target = $region48
        $region47: #{tpu_custom_call.1} parent=43 // pred_region
          %s535 = sand.u32 %s113, 1
          %s536 = scalar_lea.sflag [#allocation4], %s535
          %s537 = sand.u32 %s113, 1
          %s538 = smul.addr %s537, 2
          %s539 = scalar_lea.vmem [#allocation5], %s538
          %540 = dma.done %s536, 32
        $region48: #{tpu_custom_call.1} parent=43 // pred_fallthru
          _
      $region44: #{tpu_custom_call.1} parent=5 // pred_fallthru
        _
    $region6: #{tpu_custom_call.1} parent=1 // loop_footer
      %s19 = sadd.s32 1, %s15
    $region7: #{tpu_custom_call.1} parent=1 // loop_footer_branch
      %14 = sbr.rel target = $region3
    $region8: #{tpu_custom_call.1} parent=1 // loop_exit
      _
    %541 = vsyncpa [#allocation3], 1
    %s542 = scalar_lea.sflag [#allocation3], 1
    %543 = vsyncpa %s542, 1
    %544 = vsyncpa [#allocation4], 1
    %s545 = scalar_lea.sflag [#allocation4], 1
    %546 = vsyncpa %s545, 1

</llo_original>
